<compile_context>
chip_gen: v5e
topology: v5e:2x2
jax: 0.10.0
libtpu: 0.0.40
codegen_flags: <defaults>
</compile_context>

<pallas_src>
import functools

import jax
import jax.numpy as jnp
from jax import lax
from jax.experimental import pallas as pl
from jax.experimental.pallas import tpu as pltpu


def _single_attention_kernel(x_ref, w_ref, b_ref, acc_ref, *,
                             pack, dv, tile_rows, steps_per_partial,
                             seq_len, has_ragged):
    """One grid step over a [tile_rows, pack*df] lane-packed tile of x.

    x_ref  : [tile_rows, pack*df]        pack original rows per packed row
    w_ref  : [pack*df, pack*dv + pack]   block-diagonal [wv | u] per group
    b_ref  : [1, pack*dv + pack]         [bv]*pack ++ [c]*pack  (f32)
    acc_ref: [1, 1, pack*dv + pack]      running (sum exp(e)*V | sum exp(e))
    """
    part = pl.program_id(0)
    step = pl.program_id(1)

    @pl.when(step == 0)
    def _init():
        acc_ref[...] = jnp.zeros_like(acc_ref)

    nv = pack * dv
    fused = jnp.dot(x_ref[...], w_ref[...],
                    preferred_element_type=jnp.float32) + b_ref[...]   # [T, nv+pack] f32
    v = fused[:, :nv]                                # V (+ bias), grouped per packed slot
    e = fused[:, nv:]                                # [T, pack] pre-tanh scores
    s = jnp.exp(jnp.tanh(e))                         # softmax numerators, in [1/e, e]

    def accumulate(s_vals, v_vals):
        # Broadcast each group's score column across that group's dv V columns,
        # then reduce rows once into the resident accumulator row.
        sbig = jnp.concatenate(
            [jnp.broadcast_to(s_vals[:, j:j + 1], (tile_rows, dv))
             for j in range(pack)], axis=1)          # [T, pack*dv]
        contrib = jnp.concatenate([v_vals * sbig, s_vals], axis=1)
        acc_ref[...] += jnp.sum(contrib, axis=0, keepdims=True)[None]

    if not has_ragged:
        accumulate(s, v)                             # fast path: no mask code at all
    else:
        tile = part * steps_per_partial + step
        tile_end = (tile + 1) * (tile_rows * pack)   # exclusive end (original row idx)
        needs_mask = tile_end > seq_len

        @pl.when(jnp.logical_not(needs_mask))
        def _full_tile():
            accumulate(s, v)

        @pl.when(needs_mask)
        def _ragged_tile():
            base = tile * (tile_rows * pack)
            rows = (base
                    + pack * lax.broadcasted_iota(jnp.int32, (tile_rows, pack), 0)
                    + lax.broadcasted_iota(jnp.int32, (tile_rows, pack), 1))
            valid = rows < seq_len                   # [T, pack]
            # Mask BOTH s and v with where(): out-of-bounds rows may hold
            # garbage that became Inf/NaN and 0*Inf would poison the sums.
            s_m = jnp.where(valid, s, 0.0)
            valid_big = jnp.concatenate(
                [jnp.broadcast_to(valid[:, j:j + 1], (tile_rows, dv))
                 for j in range(pack)], axis=1)
            v_m = jnp.where(valid_big, v, 0.0)
            accumulate(s_m, v_m)


def single_attention(r, x, params, *, block_n=8192, num_partials=2,
                     compute_dtype=jnp.bfloat16):
    """r: [df], x: [N, df] -> r_x: [dv].  Matches SingleAttention.forward."""
    wk, bk, wv, bv, ww, bw = params
    n, df = x.shape
    dv = wv.shape[1]

    # --- algebraic fold of the e-path (once, outside the kernel) ------------
    #   e = tanh((K @ ww + bw) @ r) = tanh(x @ (wk @ (ww@r)) + bk @ (ww@r) + bw @ r)
    wr = ww @ r                           # [dk]
    u = wk @ wr                           # [df]
    c = bk @ wr + bw @ r                  # scalar

    # --- lane packing: free row-major view [N, df] -> [N/pack, pack*df] -----
    pack = (128 // df) if (df <= 128 and 128 % df == 0) else 1
    pad = (-n) % pack
    if pad:
        # TODO(synk): padding copies x once when N % pack != 0; callers can
        # avoid it by supplying N as a multiple of pack.
        x = jnp.pad(x, ((0, pad), (0, 0)))
    npk = (n + pad) // pack               # packed rows
    x_packed = x.reshape(npk, pack * df).astype(compute_dtype)

    # --- block-diagonal fused weight: [wv | u] replicated per packed group --
    nv = pack * dv
    ncols = nv + pack
    w_pack = jnp.zeros((pack * df, ncols), jnp.float32)
    for j in range(pack):
        w_pack = w_pack.at[j * df:(j + 1) * df, j * dv:(j + 1) * dv].set(wv)
        w_pack = w_pack.at[j * df:(j + 1) * df, nv + j].set(u)
    w_pack = w_pack.astype(compute_dtype)
    b_pack = jnp.concatenate([jnp.tile(bv, pack),
                              jnp.full((pack,), c, jnp.float32)])[None, :]
    b_pack = b_pack.astype(jnp.float32)

    # --- grid: (partials, reduction steps) -----------------------------------
    sub = 32 // jnp.dtype(compute_dtype).itemsize       # sublane granule (8 f32 / 16 bf16)
    tile_rows = min(block_n // pack, npk)
    tile_rows = max(sub, (tile_rows // sub) * sub)
    steps_total = pl.cdiv(npk, tile_rows)
    nparts = max(1, min(num_partials, steps_total))
    spp = pl.cdiv(steps_total, nparts)
    covered_rows = nparts * spp * tile_rows * pack
    has_ragged = covered_rows != n        # wrapper pad, ragged last block, or OOB tiles
    last_block = steps_total - 1
    clamp = nparts * spp > steps_total    # static: some tiles are fully out of bounds

    def x_map(p, i):
        t = p * spp + i
        return (jnp.minimum(t, last_block) if clamp else t, 0)

    kernel = functools.partial(
        _single_attention_kernel,
        pack=pack, dv=dv, tile_rows=tile_rows, steps_per_partial=spp,
        seq_len=n, has_ragged=has_ragged)

    acc = pl.pallas_call(
        kernel,
        out_shape=jax.ShapeDtypeStruct((nparts, 1, ncols), jnp.float32),
        grid_spec=pltpu.PrefetchScalarGridSpec(
            num_scalar_prefetch=0,
            grid=(nparts, spp),
            in_specs=[
                pl.BlockSpec((tile_rows, pack * df), x_map),             # streamed x
                pl.BlockSpec((pack * df, ncols), lambda p, i: (0, 0)),   # resident weight
                pl.BlockSpec((1, ncols), lambda p, i: (0, 0)),           # resident bias
            ],
            out_specs=pl.BlockSpec((1, 1, ncols), lambda p, i: (p, 0, 0)),
        ),
        compiler_params=pltpu.CompilerParams(
            # Leading axis shards across TensorCores on v7x (2 TCs); the
            # reduction axis stays sequential per core.
            dimension_semantics=("parallel", "arbitrary"),
        ),
    )(x_packed, w_pack, b_pack)

    # --- tiny exact combine in the wrapper (exact division, no approx recip) -
    total = jnp.sum(acc.reshape(nparts, ncols), axis=0)     # [ncols]
    numer = jnp.sum(total[:nv].reshape(pack, dv), axis=0)   # [dv]
    denom = jnp.sum(total[nv:])
    return numer / denom


def init_params(key, df, dk, dv):
    """Deterministic Linear-style init (weights stored [in, out])."""
    ks = jax.random.split(key, 6)

    def lin(kw, kb, fan_in, fan_out):
        bound = 1.0 / jnp.sqrt(fan_in)
        w = jax.random.uniform(kw, (fan_in, fan_out), jnp.float32, -bound, bound)
        b = jax.random.uniform(kb, (fan_out,), jnp.float32, -bound, bound)
        return w, b

    wk, bk = lin(ks[0], ks[1], df, dk)   # W_K: Linear(df -> dk)
    wv, bv = lin(ks[2], ks[3], df, dv)   # W_V: Linear(df -> dv)
    ww, bw = lin(ks[4], ks[5], dk, df)   # W  : Linear(dk -> df)
    return wk, bk, wv, bv, ww, bw


def reference(r, x, params):
    """Unfolded pure-JAX f32 reference matching the PyTorch module."""
    wk, bk, wv, bv, ww, bw = params
    K = x @ wk + bk
    V = x @ wv + bv
    e = jnp.tanh((K @ ww + bw) @ r)
    a = jax.nn.softmax(e, axis=0)
    return V.T @ a


if __name__ == "__main__":
    df, dk, dv = 32, 16, 16

    key = jax.random.PRNGKey(0)
    k_params, k_r, *k_xs = jax.random.split(key, 7)
    params = init_params(k_params, df, dk, dv)
    r = jax.random.normal(k_r, (df,), jnp.float32)

    # (N, block_n, compute_dtype, atol, rtol)
    cases = [
        (256,  128, jnp.float32,  1e-3, 1e-3),   # exact tiling, 2 partials, fast path
        (200,  128, jnp.float32,  1e-3, 1e-3),   # ragged last packed tile
        (1200, 256, jnp.float32,  1e-3, 1e-3),   # multi-step partials + clamped OOB tile
        (203,  256, jnp.float32,  1e-3, 1e-3),   # N % 4 != 0 (wrapper pad) + ragged
        (1200, 256, jnp.bfloat16, 5e-3, 5e-2),   # bf16 streaming path (default dtype)
    ]
    for idx, (n, bn, cdt, atol, rtol) in enumerate(cases):
        x = jax.random.normal(k_xs[idx], (n, df), jnp.float32)
        out = single_attention(r, x, params, block_n=bn, compute_dtype=cdt)
        jax.block_until_ready(out)
        ref = reference(r, x, params)
        assert out.shape == (dv,)
        assert jnp.allclose(out, ref, atol=atol, rtol=rtol), (n, bn, cdt, out, ref)

    print("KERNEL_OK")
</pallas_src>

<mosaic_0001>
module attributes {stable_mosaic.version = 11 : i64} {
  func.func @_single_attention_kernel(%arg0: i32, %arg1: i32, %arg2: memref<32x128xf32, #tpu.memory_space<vmem>>, %arg3: memref<128x68xf32, #tpu.memory_space<vmem>>, %arg4: memref<1x68xf32, #tpu.memory_space<vmem>>, %arg5: memref<1x1x68xf32, #tpu.memory_space<vmem>>) attributes {dimension_semantics = [#tpu.dimension_semantics<parallel>, #tpu.dimension_semantics<arbitrary>], iteration_bounds = array<i64: 2, 1>, scalar_prefetch = 0 : i64, scratch_operands = 0 : i64, tpu.core_type = #tpu.core_type<tc>, window_params = [{transform_indices = @transform_0, window_bounds = array<i64: 32, 128>}, {pipeline_mode = #tpu.pipeline_mode<synchronous>, transform_indices = @transform_1, window_bounds = array<i64: 128, 68>}, {pipeline_mode = #tpu.pipeline_mode<synchronous>, transform_indices = @transform_2, window_bounds = array<i64: 1, 68>}, {transform_indices = @transform_3, window_bounds = array<i64: 1, 1, 68>}]} {
    %c0_i32 = arith.constant 0 : i32
    %0 = arith.cmpi eq, %arg1, %c0_i32 : i32
    %1 = arith.extui %0 : i1 to i32
    %c0_i32_0 = arith.constant 0 : i32
    %2 = arith.cmpi ne, %1, %c0_i32_0 : i32
    scf.if %2 {
      %cst_13 = arith.constant 0.000000e+00 : f32
      %34 = vector.broadcast %cst_13 : f32 to vector<1x1x68xf32>
      %c0_14 = arith.constant 0 : index
      %c0_15 = arith.constant 0 : index
      %c0_16 = arith.constant 0 : index
      %35 = vector.load %arg5[%c0_14, %c0_15, %c0_16] : memref<1x1x68xf32, #tpu.memory_space<vmem>>, vector<1x1x68xf32>
      tpu.vector_store %arg5[%c0_14, %c0_15, %c0_16], %34 {strides = array<i32>} : memref<1x1x68xf32, #tpu.memory_space<vmem>>, vector<1x1x68xf32>,
    } else {
    }
    %c0 = arith.constant 0 : index
    %c0_1 = arith.constant 0 : index
    %3 = vector.load %arg2[%c0, %c0_1] : memref<32x128xf32, #tpu.memory_space<vmem>>, vector<32x128xf32>
    %c0_2 = arith.constant 0 : index
    %c0_3 = arith.constant 0 : index
    %4 = vector.load %arg3[%c0_2, %c0_3] : memref<128x68xf32, #tpu.memory_space<vmem>>, vector<128x68xf32>
    %cst = arith.constant dense<0.000000e+00> : vector<32x68xf32>
    %5 = tpu.matmul %3, %4, %cst {dimension_numbers = #tpu.dot_dimension_numbers<[1], [0], [0], [1], [0, 0, 1, 1], [], []>} : vector<32x128xf32>, vector<128x68xf32>, vector<32x68xf32> -> vector<32x68xf32>
    %c0_4 = arith.constant 0 : index
    %c0_5 = arith.constant 0 : index
    %6 = vector.load %arg4[%c0_4, %c0_5] : memref<1x68xf32, #tpu.memory_space<vmem>>, vector<1x68xf32>
    %7 = vector.broadcast %6 : vector<1x68xf32> to vector<32x68xf32>
    %8 = arith.addf %5, %7 : vector<32x68xf32>
    %9 = vector.extract_strided_slice %8 {offsets = [0, 0], sizes = [32, 64], strides = [1, 1]} : vector<32x68xf32> to vector<32x64xf32>
    %10 = vector.extract_strided_slice %8 {offsets = [0, 64], sizes = [32, 4], strides = [1, 1]} : vector<32x68xf32> to vector<32x4xf32>
    %11 = math.tanh %10 : vector<32x4xf32>
    %12 = math.exp %11 : vector<32x4xf32>
    %13 = vector.extract_strided_slice %12 {offsets = [0, 0], sizes = [32, 1], strides = [1, 1]} : vector<32x4xf32> to vector<32x1xf32>
    %14 = vector.shape_cast %13 : vector<32x1xf32> to vector<32x1xf32>
    %15 = vector.broadcast %14 : vector<32x1xf32> to vector<32x16xf32>
    %16 = vector.extract_strided_slice %12 {offsets = [0, 1], sizes = [32, 1], strides = [1, 1]} : vector<32x4xf32> to vector<32x1xf32>
    %17 = vector.shape_cast %16 : vector<32x1xf32> to vector<32x1xf32>
    %18 = vector.broadcast %17 : vector<32x1xf32> to vector<32x16xf32>
    %19 = vector.extract_strided_slice %12 {offsets = [0, 2], sizes = [32, 1], strides = [1, 1]} : vector<32x4xf32> to vector<32x1xf32>
    %20 = vector.shape_cast %19 : vector<32x1xf32> to vector<32x1xf32>
    %21 = vector.broadcast %20 : vector<32x1xf32> to vector<32x16xf32>
    %22 = vector.extract_strided_slice %12 {offsets = [0, 3], sizes = [32, 1], strides = [1, 1]} : vector<32x4xf32> to vector<32x1xf32>
    %23 = vector.shape_cast %22 : vector<32x1xf32> to vector<32x1xf32>
    %24 = vector.broadcast %23 : vector<32x1xf32> to vector<32x16xf32>
    %25 = tpu.concatenate %15, %18, %21, %24 in 1 : vector<32x16xf32>, vector<32x16xf32>, vector<32x16xf32>, vector<32x16xf32> -> vector<32x64xf32>
    %26 = arith.mulf %9, %25 : vector<32x64xf32>
    %27 = tpu.concatenate %26, %12 in 1 : vector<32x64xf32>, vector<32x4xf32> -> vector<32x68xf32>
    %c0_6 = arith.constant 0 : index
    %c0_7 = arith.constant 0 : index
    %c0_8 = arith.constant 0 : index
    %28 = vector.load %arg5[%c0_6, %c0_7, %c0_8] : memref<1x1x68xf32, #tpu.memory_space<vmem>>, vector<1x1x68xf32>
    %cst_9 = arith.constant dense<0.000000e+00> : vector<68xf32>
    %29 = vector.multi_reduction <add>, %27, %cst_9 [0] : vector<32x68xf32> to vector<68xf32>
    %30 = vector.shape_cast %29 : vector<68xf32> to vector<1x68xf32>
    %31 = vector.shape_cast %30 : vector<1x68xf32> to vector<1x1x68xf32>
    %32 = arith.addf %28, %31 : vector<1x1x68xf32>
    %c0_10 = arith.constant 0 : index
    %c0_11 = arith.constant 0 : index
    %c0_12 = arith.constant 0 : index
    %33 = vector.load %arg5[%c0_10, %c0_11, %c0_12] : memref<1x1x68xf32, #tpu.memory_space<vmem>>, vector<1x1x68xf32>
    tpu.vector_store %arg5[%c0_10, %c0_11, %c0_12], %32 {strides = array<i32>} : memref<1x1x68xf32, #tpu.memory_space<vmem>>, vector<1x1x68xf32>,
    return
  }
  func.func @transform_0(%arg0: i32, %arg1: i32) -> (i32, i32) {
    %c1_i32 = arith.constant 1 : i32
    %0 = arith.muli %arg0, %c1_i32 : i32
    %1 = arith.addi %0, %arg1 : i32
    %c0_i32 = arith.constant 0 : i32
    %c0_i32_0 = arith.constant 0 : i32
    return %1, %c0_i32 : i32, i32
  }
  func.func @transform_1(%arg0: i32, %arg1: i32) -> (i32, i32) {
    %c0_i32 = arith.constant 0 : i32
    %c0_i32_0 = arith.constant 0 : i32
    %c0_i32_1 = arith.constant 0 : i32
    return %c0_i32, %c0_i32_0 : i32, i32
  }
  func.func @transform_2(%arg0: i32, %arg1: i32) -> (i32, i32) {
    %c0_i32 = arith.constant 0 : i32
    %c0_i32_0 = arith.constant 0 : i32
    %c0_i32_1 = arith.constant 0 : i32
    return %c0_i32, %c0_i32_0 : i32, i32
  }
  func.func @transform_3(%arg0: i32, %arg1: i32) -> (i32, i32, i32) {
    %c0_i32 = arith.constant 0 : i32
    %c0_i32_0 = arith.constant 0 : i32
    %c0_i32_1 = arith.constant 0 : i32
    return %arg0, %c0_i32, %c0_i32_0 : i32, i32, i32
  }
}

</mosaic_0001>

<llo_original>
// kernel: tpu_custom_call.1
$region0: #{tpu_custom_call.1}
  #allocation0 [shape = 'u32[]', space=smem, size = 0x4, offset = 0x4, fixed_abs, tag = 'smem constant byte address 0x4 - core index']
  #allocation1 [shape = 'u32[72,128]{1,0:T(1,128)}', space=vmem, size = 0x9000, scoped, tag = 'internal scratch']
  %s0 = inlined_call_operand.vmem [shape: f32[64,128], index: 0, kind: input, shape index: {}]
  %s1 = inlined_call_operand.vmem [shape: f32[128,68], index: 1, kind: input, shape index: {}]
  %s2 = inlined_call_operand.vmem [shape: f32[1,68], index: 2, kind: input, shape index: {}]
  %s3 = inlined_call_operand.hbm [shape: f32[2,1,68], index: 3, kind: output, shape index: {}]
  %s4 = sld [smem:[#allocation0]]
  $region49: #{tpu_custom_call.1} parent=0
    _
  %s6 = ssub.s32 1, %s4
  %s7 = scalar_select 0, %s6, %s4
  $region1: #{tpu_custom_call.1} parent=0
    #allocation2 [shape = 'u8[1024]{0}', space=vmem, size = 0x400, scoped, tag = 'output window, operand 0']
    #allocation3 [shape = 's32[2]{0}', space=sflag, size = 0x8, scoped, tag = 'scoped memory for tpu_custom_call.1']
    %8 = vsyncpa [#allocation3], 0
    %s9 = scalar_lea.sflag [#allocation3], 1
    %10 = vsyncpa %s9, 0
    loop: start=0, step=1, limit=4
    $region2: #{tpu_custom_call.1} parent=1 // loop_pre_header
      _
    $region3: #{tpu_custom_call.1} parent=1 // loop_header
      %s12 = sphi 0, %s16
      %p13 = scmp.ge.s32.totalorder %s12, 4
      %s19 = sphi 0, %s31
      %s20 = sphi 0, %s27
      %s21 = sphi 0, %s19
      %s22 = sphi 0, %s20
      %s23 = sphi 0, %s21
      %s24 = sphi 0, %s22
      %s36 = sphi 0, %s38
      %s39 = sphi 0, %s36
      %s40 = sphi 0, %s39
      %s56 = sphi 0, %s40
      %s60 = sphi 0, %s60
      %s62 = sphi 0, %s60
      %s63 = sphi 0, %s62
      %s77 = sphi 0, %s63
      %s81 = sphi 0, %s81
      %s83 = sphi 0, %s81
      %s84 = sphi 0, %s83
      %s98 = sphi 0, %s84
      %s104 = sphi 0, %s106
      %s107 = sphi 0, %s104
      %s108 = sphi 0, %s107
      %s124 = sphi 0, %s108
    $region4: #{tpu_custom_call.1} parent=1 // loop_header_branch
      %15 = sbr.rel (%p13) target = $region8
    $region5: #{tpu_custom_call.1} parent=1 // loop_body
      %s17 = ssub.s32 %s12, 1
      %s18 = ssub.s32 %s12, 2
      %s25 = sadd.s32 1, %s20
      %p26 = scmp.ge.s32.totalorder %s25, 1
      %s27 = scalar_select %p26, 0, %s25
      %s28 = sadd.s32 1, %s19
      %s29 = scalar_select %p26, %s28, %s19
      %p30 = scmp.ge.s32.totalorder %s29, 2
      %s31 = scalar_select %p30, 0, %s29
      %s32 = sadd.s32 %s19, %s20
      %s33 = sadd.s32 %s31, %s27
      %s34 = ssub.s32 %s32, %s33
      %p35 = scmp.eq.s32.totalorder %s34, 0
      %s37 = sadd.s32 %s36, 1
      %s38 = scalar_select %p35, %s36, %s37
      %p41 = pneg %p35
      %p42 = scmp.eq.s32.totalorder %s12, 1
      %p43 = por %p41, %p42
      %p44 = scmp.ne.s32.totalorder %s36, %s39
      %p45 = scmp.eq.s32.totalorder %s12, 0
      %p46 = por %p44, %p45
      %p47 = scmp.ne.s32.totalorder %s36, %s39
      %p48 = scmp.eq.s32.totalorder %s17, 1
      %p49 = por %p47, %p48
      %p50 = scmp.ne.s32.totalorder %s39, %s40
      %p51 = scmp.eq.s32.totalorder %s17, 0
      %p52 = por %p50, %p51
      %p53 = scmp.ne.s32.totalorder %s39, %s40
      %p54 = scmp.eq.s32.totalorder %s18, 1
      %p55 = por %p53, %p54
      %p57 = scmp.ne.s32.totalorder %s40, %s56
      %p58 = scmp.eq.s32.totalorder %s18, 0
      %p59 = por %p57, %p58
      %s61 = sadd.s32 %s60, 1
      %p64 = scmp.eq.s32.totalorder %s12, 1
      %p65 = scmp.ne.s32.totalorder %s60, %s62
      %p66 = scmp.eq.s32.totalorder %s12, 0
      %p67 = por %p65, %p66
      %p68 = scmp.ne.s32.totalorder %s60, %s62
      %p69 = scmp.eq.s32.totalorder %s17, 1
      %p70 = por %p68, %p69
      %p71 = scmp.ne.s32.totalorder %s62, %s63
      %p72 = scmp.eq.s32.totalorder %s17, 0
      %p73 = por %p71, %p72
      %p74 = scmp.ne.s32.totalorder %s62, %s63
      %p75 = scmp.eq.s32.totalorder %s18, 1
      %p76 = por %p74, %p75
      %p78 = scmp.ne.s32.totalorder %s63, %s77
      %p79 = scmp.eq.s32.totalorder %s18, 0
      %p80 = por %p78, %p79
      %s82 = sadd.s32 %s81, 1
      %p85 = scmp.eq.s32.totalorder %s12, 1
      %p86 = scmp.ne.s32.totalorder %s81, %s83
      %p87 = scmp.eq.s32.totalorder %s12, 0
      %p88 = por %p86, %p87
      %p89 = scmp.ne.s32.totalorder %s81, %s83
      %p90 = scmp.eq.s32.totalorder %s17, 1
      %p91 = por %p89, %p90
      %p92 = scmp.ne.s32.totalorder %s83, %s84
      %p93 = scmp.eq.s32.totalorder %s17, 0
      %p94 = por %p92, %p93
      %p95 = scmp.ne.s32.totalorder %s83, %s84
      %p96 = scmp.eq.s32.totalorder %s18, 1
      %p97 = por %p95, %p96
      %p99 = scmp.ne.s32.totalorder %s84, %s98
      %p100 = scmp.eq.s32.totalorder %s18, 0
      %p101 = por %p99, %p100
      %s102 = ssub.s32 %s19, %s31
      %p103 = scmp.eq.s32.totalorder %s102, 0
      %s105 = sadd.s32 %s104, 1
      %s106 = scalar_select %p103, %s104, %s105
      %p109 = pneg %p103
      %p110 = scmp.eq.s32.totalorder %s12, 1
      %p111 = por %p109, %p110
      %p112 = scmp.ne.s32.totalorder %s104, %s107
      %p113 = scmp.eq.s32.totalorder %s12, 0
      %p114 = por %p112, %p113
      %p115 = scmp.ne.s32.totalorder %s104, %s107
      %p116 = scmp.eq.s32.totalorder %s17, 1
      %p117 = por %p115, %p116
      %p118 = scmp.ne.s32.totalorder %s107, %s108
      %p119 = scmp.eq.s32.totalorder %s17, 0
      %p120 = por %p118, %p119
      %p121 = scmp.ne.s32.totalorder %s107, %s108
      %p122 = scmp.eq.s32.totalorder %s18, 1
      %p123 = por %p121, %p122
      %p125 = scmp.ne.s32.totalorder %s108, %s124
      %p126 = scmp.eq.s32.totalorder %s18, 0
      %p127 = por %p125, %p126
      %p128 = scmp.le.s32.totalorder 1, %s12
      %p129 = scmp.lt.s32.totalorder %s12, 3
      %p130 = pnand %p128, %p129
      %p131 = pneg %p130
      // Predicated region
      $region9: #{tpu_custom_call.1} parent=5 // pred_check
        _
      $region10: #{tpu_custom_call.1} parent=5 // pred_check_branch
        %133 = sbr.rel (%p130) target = $region12
      $region11: #{tpu_custom_call.1} parent=5 // pred_region
        %s134 = ssub.s32 %s12, 1
        // Predicated region
        $region13: #{tpu_custom_call.1} parent=11 // pred_check
          %p135 = pneg %p73
        $region14: #{tpu_custom_call.1} parent=11 // pred_check_branch
          %137 = sbr.rel (%p135) target = $region16
        $region15: #{tpu_custom_call.1} parent=11 // pred_region
          _
        $region16: #{tpu_custom_call.1} parent=11 // pred_fallthru
          _
        // Predicated region
        $region17: #{tpu_custom_call.1} parent=11 // pred_check
          %p138 = pneg %p94
        $region18: #{tpu_custom_call.1} parent=11 // pred_check_branch
          %140 = sbr.rel (%p138) target = $region20
        $region19: #{tpu_custom_call.1} parent=11 // pred_region
          _
        $region20: #{tpu_custom_call.1} parent=11 // pred_fallthru
          _
      $region12: #{tpu_custom_call.1} parent=5 // pred_fallthru
        _
      %p141 = scmp.lt.s32.totalorder %s12, 2
      // Predicated region
      $region21: #{tpu_custom_call.1} parent=5 // pred_check
        %p142 = pneg %p141
      $region22: #{tpu_custom_call.1} parent=5 // pred_check_branch
        %144 = sbr.rel (%p142) target = $region24
      $region23: #{tpu_custom_call.1} parent=5 // pred_region
        // Predicated region
        $region25: #{tpu_custom_call.1} parent=23 // pred_check
          %p145 = pneg %p46
        $region26: #{tpu_custom_call.1} parent=23 // pred_check_branch
          %147 = sbr.rel (%p145) target = $region28
        $region27: #{tpu_custom_call.1} parent=23 // pred_region
          %s148 = sadd.s32 %s19, %s20
          %s149 = smul.u32 4, %s148
          %p150 = scmp.lt.s32.totalorder %s149, 7
          %s151 = scalar_select %p150, %s149, 7
          %s152 = smul.addr %s151, 8
          %s153 = scalar_lea.vmem %s0, %s152
          %s154 = sadd.s32 %s19, %s20
          %s155 = smul.u32 4, %s154
        $region28: #{tpu_custom_call.1} parent=23 // pred_fallthru
          _
      $region24: #{tpu_custom_call.1} parent=5 // pred_fallthru
        _
      %p156 = scmp.le.s32.totalorder 1, %s12
      %p157 = scmp.lt.s32.totalorder %s12, 3
      %p158 = pnand %p156, %p157
      %p159 = pneg %p158
      // Predicated region
      $region29: #{tpu_custom_call.1} parent=5 // pred_check
        _
      $region30: #{tpu_custom_call.1} parent=5 // pred_check_branch
        %161 = sbr.rel (%p158) target = $region32
      $region31: #{tpu_custom_call.1} parent=5 // pred_region
        %s162 = ssub.s32 %s12, 1
        %s163 = sadd.s32 %s21, %s22
        %s164 = smul.u32 4, %s163
        %p165 = scmp.lt.s32.totalorder %s164, 7
        %s166 = scalar_select %p165, %s164, 7
        %s167 = smul.addr %s166, 8
        %s168 = scalar_lea.vmem %s0, %s167
        %p169 = pneg %p52
        %p170 = pneg %p49
        %p171 = pneg %p73
        %p172 = pneg %p70
        %p173 = pneg %p94
        %p174 = pneg %p91
        %p175 = pneg %p120
        %p176 = pneg %p117
        %s177 = sand.u32 %s107, 1
        %s178 = scalar_lea.sflag [#allocation3], %s177
        %s179 = sand.u32 %s107, 1
        %s180 = scalar_lea.vmem [#allocation2], %s179
        %s181 = sadd.s32 %s21, %s22
        %s182 = smul.u32 4, %s181
        %p183 = scmp.lt.s32.totalorder %s182, 7
        %s184 = scalar_select %p183, %s182, 7
        %s185 = smul.addr %s184, 8
        %s186 = scalar_lea.vmem %s0, %s185
        %s187 = sadd.s32 %s21, %s22
        %s188 = smul.u32 4, %s187
        %p189 = scmp.eq.s32.totalorder %s22, 0
        // Predicated region
        $region33: #{tpu_custom_call.1} parent=31 // pred_check
          %p190 = pneg %p189
        $region34: #{tpu_custom_call.1} parent=31 // pred_check_branch
          %192 = sbr.rel (%p190) target = $region36
        $region35: #{tpu_custom_call.1} parent=31 // pred_region
          %vm193 = vcmask 548864
          %194 = vst.msk [vmem:[%s180] sm:$0x1] %vm193, 0.0
        $region36: #{tpu_custom_call.1} parent=31 // pred_fallthru
          _
        %v195 = vld [vmem:[%s186] sm:$0xff]
        %v196 = vld [vmem:[%s186 + $0x8] sm:$0xff]
        %v197 = vld [vmem:[%s186 + $0x10] sm:$0xff]
        %v198 = vld [vmem:[%s186 + $0x18] sm:$0xff]
        %v199 = vld [vmem:[%s1] sm:$0xff]
        %v200 = vld [vmem:[%s1 + $0x8] sm:$0xff]
        %v201 = vld [vmem:[%s1 + $0x10] sm:$0xff]
        %v202 = vld [vmem:[%s1 + $0x18] sm:$0xff]
        %v203 = vld [vmem:[%s1 + $0x20] sm:$0xff]
        %v204 = vld [vmem:[%s1 + $0x28] sm:$0xff]
        %v205 = vld [vmem:[%s1 + $0x30] sm:$0xff]
        %v206 = vld [vmem:[%s1 + $0x38] sm:$0xff]
        %v207 = vld [vmem:[%s1 + $0x40] sm:$0xff]
        %v208 = vld [vmem:[%s1 + $0x48] sm:$0xff]
        %v209 = vld [vmem:[%s1 + $0x50] sm:$0xff]
        %v210 = vld [vmem:[%s1 + $0x58] sm:$0xff]
        %v211 = vld [vmem:[%s1 + $0x60] sm:$0xff]
        %v212 = vld [vmem:[%s1 + $0x68] sm:$0xff]
        %v213 = vld [vmem:[%s1 + $0x70] sm:$0xff]
        %v214 = vld [vmem:[%s1 + $0x78] sm:$0xff]
        %v215 = vld [vmem:[%s2] sm:$0x1]
        %v217 = vperm.slane %v215, 0
        %219 = vmatpush.msra.mxu0 %v214
        %220 = vmatpush.msra.mxu0 %v213
        %221 = vmatpush.msra.mxu0 %v212
        %222 = vmatpush.msra.mxu0 %v211
        %223 = vmatpush.msra.mxu0 %v210
        %224 = vmatpush.msra.mxu0 %v209
        %225 = vmatpush.msra.mxu0 %v208
        %226 = vmatpush.msra.mxu0 %v207
        %227 = vmatpush.msra.mxu0 %v206
        %228 = vmatpush.msra.mxu0 %v205
        %229 = vmatpush.msra.mxu0 %v204
        %230 = vmatpush.msra.mxu0 %v203
        %231 = vmatpush.msra.mxu0 %v202
        %232 = vmatpush.msra.mxu0 %v201
        %233 = vmatpush.msra.mxu0 %v200
        %234 = vmatpush.msra.mxu0 %v199
        %235 = vmatmul.f32.gmra.mxu0 %v195
        %v236 = vpop.f32.mrf.mxu0
        %v237 = vadd.f32 %v217, %v236
        %238 = vmatmul.f32.gmra.mxu0 %v196
        %v239 = vpop.f32.mrf.mxu0
        %v240 = vadd.f32 %v217, %v239
        %241 = vmatmul.f32.gmra.mxu0 %v197
        %v242 = vpop.f32.mrf.mxu0
        %v243 = vadd.f32 %v217, %v242
        %244 = vmatmul.f32.gmra.mxu0 %v198
        %v245 = vpop.f32.mrf.mxu0
        %v246 = vadd.f32 %v217, %v245
        %247 = vdwg.mxu0
        %v248 = vtanh.pop %v237
        %v249 = vtanh.pop %v240
        %v250 = vtanh.pop %v243
        %v251 = vtanh.pop %v246
        %v252 = vmul.f32 %v248, 1.442695
        %v253 = vpow.pop %v252
        %v254 = vmul.f32 %v249, 1.442695
        %v255 = vpow.pop %v254
        %v256 = vmul.f32 %v250, 1.442695
        %v257 = vpow.pop %v256
        %v258 = vmul.f32 %v251, 1.442695
        %v259 = vpow.pop %v258
        %261 = vset.pattern.permute.xlu0 64
        %262 = vperm.xlu0 %261, %v253
        %v263 = vpop.permute.xlu0 %262
        %266 = vset.pattern.permute.xlu0 64
        %267 = vperm.xlu0 %266, %v255
        %v268 = vpop.permute.xlu0 %267
        %271 = vset.pattern.permute.xlu0 64
        %272 = vperm.xlu0 %271, %v257
        %v273 = vpop.permute.xlu0 %272
        %276 = vset.pattern.permute.xlu0 64
        %277 = vperm.xlu0 %276, %v259
        %v278 = vpop.permute.xlu0 %277
        %280 = vset.pattern.permute.xlu0 65
        %281 = vperm.xlu0 %280, %v253
        %v282 = vpop.permute.xlu0 %281
        %284 = vset.pattern.permute.xlu0 65
        %285 = vperm.xlu0 %284, %v255
        %v286 = vpop.permute.xlu0 %285
        %288 = vset.pattern.permute.xlu0 65
        %289 = vperm.xlu0 %288, %v257
        %v290 = vpop.permute.xlu0 %289
        %292 = vset.pattern.permute.xlu0 65
        %293 = vperm.xlu0 %292, %v259
        %v294 = vpop.permute.xlu0 %293
        %296 = vset.pattern.permute.xlu0 66
        %297 = vperm.xlu0 %296, %v253
        %v298 = vpop.permute.xlu0 %297
        %300 = vset.pattern.permute.xlu0 66
        %301 = vperm.xlu0 %300, %v255
        %v302 = vpop.permute.xlu0 %301
        %304 = vset.pattern.permute.xlu0 66
        %305 = vperm.xlu0 %304, %v257
        %v306 = vpop.permute.xlu0 %305
        %308 = vset.pattern.permute.xlu0 66
        %309 = vperm.xlu0 %308, %v259
        %v310 = vpop.permute.xlu0 %309
        %312 = vset.pattern.permute.xlu0 67
        %313 = vperm.xlu0 %312, %v253
        %v314 = vpop.permute.xlu0 %313
        %316 = vset.pattern.permute.xlu0 67
        %317 = vperm.xlu0 %316, %v255
        %v318 = vpop.permute.xlu0 %317
        %320 = vset.pattern.permute.xlu0 67
        %321 = vperm.xlu0 %320, %v257
        %v322 = vpop.permute.xlu0 %321
        %324 = vset.pattern.permute.xlu0 67
        %325 = vperm.xlu0 %324, %v259
        %v326 = vpop.permute.xlu0 %325
        %vm328 = vcmask 130048
        %v329 = vsel %vm328, %v263, %v282
        %v330 = vsel %vm328, %v268, %v286
        %v331 = vsel %vm328, %v273, %v290
        %v332 = vsel %vm328, %v278, %v294
        %vm333 = vcmask 261120
        %v334 = vsel %vm333, %v329, %v298
        %v335 = vsel %vm333, %v330, %v302
        %v336 = vsel %vm333, %v331, %v306
        %v337 = vsel %vm333, %v332, %v310
        %vm338 = vcmask 392192
        %v339 = vsel %vm338, %v334, %v314
        %v340 = vsel %vm338, %v335, %v318
        %v341 = vsel %vm338, %v336, %v322
        %v342 = vsel %vm338, %v337, %v326
        %v343 = vmul.f32 %v237, %v339
        %v344 = vmul.f32 %v240, %v340
        %v345 = vmul.f32 %v243, %v341
        %v346 = vmul.f32 %v246, %v342
        %vm347 = vcmask 523264
        %v348 = vsel %vm347, %v343, %v253
        %v349 = vsel %vm347, %v344, %v255
        %v350 = vsel %vm347, %v345, %v257
        %v351 = vsel %vm347, %v346, %v259
        %v352 = vld [vmem:[%s180] sm:$0x1]
        %vm353 = vcmask 556032
        %v354 = vsel %vm353, %v348, 0.0
        %v355 = vsel %vm353, %v349, 0.0
        %v356 = vadd.f32 %v354, %v355
        %v357 = vsel %vm353, %v350, 0.0
        %v358 = vadd.f32 %v356, %v357
        %v359 = vsel %vm353, %v351, 0.0
        %v360 = vadd.f32 %v358, %v359
        %v361 = vrot.slane %v360, 4
        %v362 = vadd.f32 %v360, %v361
        %v363 = vrot.slane %v362, 2
        %v364 = vadd.f32 %v362, %v363
        %v365 = vrot.slane %v364, 1
        %v366 = vadd.f32 %v364, %v365
        %v367 = vadd.f32 %v352, %v366
        %vm368 = vcmask 548864
        %369 = vst.msk [vmem:[%s180] sm:$0x1] %vm368, %v367
        %s370 = sand.u32 %s107, 1
        %s371 = scalar_lea.sflag [#allocation3], %s370
        %s372 = sand.u32 %s107, 1
        %s373 = scalar_lea.vmem [#allocation2], %s372
        // Predicated region
        $region37: #{tpu_custom_call.1} parent=31 // pred_check
          %p374 = pneg %p117
        $region38: #{tpu_custom_call.1} parent=31 // pred_check_branch
          %376 = sbr.rel (%p374) target = $region40
        $region39: #{tpu_custom_call.1} parent=31 // pred_region
          %378 = vsyncadd %s371, 0
          %s379 = scalar_lea.hbm %s3, %s21
          %s381 = sshll.u32 %s373, 4
          %s382 = int_to_ptr.vmem [resolvable:$true] %s381
          %s383 = sshll.u32 %s379, 4
          %s384 = int_to_ptr.hbm [resolvable:$true] %s383
          %386 = dma.vmem_to_hbm [thread:$0]  %s382, 16, %s384, %s371
        $region40: #{tpu_custom_call.1} parent=31 // pred_fallthru
          _
      $region32: #{tpu_custom_call.1} parent=5 // pred_fallthru
        _
      %p387 = scmp.le.s32.totalorder 2, %s12
      // Predicated region
      $region41: #{tpu_custom_call.1} parent=5 // pred_check
        %p388 = pneg %p387
      $region42: #{tpu_custom_call.1} parent=5 // pred_check_branch
        %390 = sbr.rel (%p388) target = $region44
      $region43: #{tpu_custom_call.1} parent=5 // pred_region
        %s391 = ssub.s32 %s12, 2
        // Predicated region
        $region45: #{tpu_custom_call.1} parent=43 // pred_check
          %p392 = pneg %p123
        $region46: #{tpu_custom_call.1} parent=43 // pred_check_branch
          %394 = sbr.rel (%p392) target = $region48
        $region47: #{tpu_custom_call.1} parent=43 // pred_region
          %s395 = sand.u32 %s108, 1
          %s396 = scalar_lea.sflag [#allocation3], %s395
          %s397 = sand.u32 %s108, 1
          %s398 = scalar_lea.vmem [#allocation2], %s397
          %400 = dma.done %s396, 16
        $region48: #{tpu_custom_call.1} parent=43 // pred_fallthru
          _
      $region44: #{tpu_custom_call.1} parent=5 // pred_fallthru
        _
    $region6: #{tpu_custom_call.1} parent=1 // loop_footer
      %s16 = sadd.s32 1, %s12
    $region7: #{tpu_custom_call.1} parent=1 // loop_footer_branch
      %11 = sbr.rel target = $region3
    $region8: #{tpu_custom_call.1} parent=1 // loop_exit
      _
    %401 = vsyncpa [#allocation3], 1
    %s402 = scalar_lea.sflag [#allocation3], 1
    %403 = vsyncpa %s402, 1

</llo_original>
